<compile_context>
chip_gen: v7x
topology: tpu7x:2x2x1
jax: 0.10.0
libtpu: 0.0.40
codegen_flags: <defaults>
</compile_context>

<pallas_src>
import functools

import numpy as np
import jax
import jax.numpy as jnp
from jax import lax
from jax.experimental import pallas as pl
from jax.experimental.pallas import tpu as pltpu

_THRESHOLD_SQUARE = 0.1
_THRESHOLD_CUBE = 0.1

_SUB = 8                      # sublanes per compute chunk (one f32 vreg row-group)
_LANES = 128
_CHUNK_B = _SUB * _LANES      # 1024 batch elements per compute chunk
_TARGET_CHUNKS = 32           # target compute chunks per grid step (32K elems)


def se3comp_kernel(xi_ref, tg_ref, out_ref, *, chunks):
    # xi_ref : (6, chunks*8, 128), tg_ref/out_ref : (7, chunks*8, 128)

    def chunk_body(c, carry):
        s = pl.multiple_of(c * _SUB, _SUB)
        sl = pl.ds(s, _SUB)

        rho1 = xi_ref[0, sl, :]
        rho2 = xi_ref[1, sl, :]
        rho3 = xi_ref[2, sl, :]
        wx = xi_ref[3, sl, :]
        wy = xi_ref[4, sl, :]
        wz = xi_ref[5, sl, :]

        # ---- so3_RV: rotation R and left-Jacobian V from omega ----
        wxx = wx * wx
        wyy = wy * wy
        wzz = wz * wz
        wxy = wx * wy
        wxz = wx * wz
        wyz = wy * wz

        th2 = wxx + wyy + wzz                      # theta^2
        nonzero = th2 > 0.0
        safe_th2 = jnp.where(nonzero, th2, 1.0)
        inv_t = lax.rsqrt(safe_th2)                # EUP rsqrt, no VALU divide
        theta = th2 * inv_t                        # == sqrt(th2) (0 when th2==0)
        inv_t2 = inv_t * inv_t
        inv_t3 = inv_t2 * inv_t
        theta_cube = th2 * theta

        sin_t = jnp.sin(theta)
        cos_t = jnp.cos(theta)

        # A = sin(theta)/theta with the NaN->0 replacement of the reference
        A = jnp.where(nonzero, sin_t * inv_t, 0.0)

        # B = (1 - cos)/theta^2 ; Taylor fallback in Horner form (constant
        # reciprocal coefficients are folded at trace time -> no divides).
        exactB = (1.0 - cos_t) * inv_t2
        taylorB = 0.5 + th2 * (-1.0 / 24.0
                  + th2 * (1.0 / 720.0
                  + th2 * (-1.0 / 40320.0
                  + th2 * (1.0 / 3628800.0))))
        Bc = jnp.where(th2 > _THRESHOLD_SQUARE, exactB,
                       jnp.where(th2 < 1e-6, 0.0, taylorB))

        # C = (theta - sin)/theta^3 ; Taylor fallback in Horner form
        exactC = (theta - sin_t) * inv_t3
        taylorC = (1.0 / 6.0) + th2 * (-1.0 / 120.0
                  + th2 * (1.0 / 5040.0
                  + th2 * (-1.0 / 362880.0
                  + th2 * (1.0 / 39916800.0))))
        Cc = jnp.where(theta_cube > _THRESHOLD_CUBE, exactC,
                       jnp.where(th2 < 1e-6, 0.0, taylorC))

        # skew(omega)^2 diagonal (off-diagonals are wxy/wxz/wyz, symmetric)
        S2_00 = -(wyy + wzz)
        S2_11 = -(wxx + wzz)
        S2_22 = -(wxx + wyy)

        # Hoisted shared products (each used twice below).
        Awx = A * wx
        Awy = A * wy
        Awz = A * wz
        Bxy = Bc * wxy
        Bxz = Bc * wxz
        Byz = Bc * wyz
        Bwx = Bc * wx
        Bwy = Bc * wy
        Bwz = Bc * wz
        Cxy = Cc * wxy
        Cxz = Cc * wxz
        Cyz = Cc * wyz

        # R = I + A*S + B*S^2
        R00 = 1.0 + Bc * S2_00
        R01 = Bxy - Awz
        R02 = Bxz + Awy
        R10 = Bxy + Awz
        R11 = 1.0 + Bc * S2_11
        R12 = Byz - Awx
        R20 = Bxz - Awy
        R21 = Byz + Awx
        R22 = 1.0 + Bc * S2_22

        # V = I + B*S + C*S^2
        V00 = 1.0 + Cc * S2_00
        V01 = Cxy - Bwz
        V02 = Cxz + Bwy
        V10 = Cxy + Bwz
        V11 = 1.0 + Cc * S2_11
        V12 = Cyz - Bwx
        V20 = Cxz - Bwy
        V21 = Cyz + Bwx
        V22 = 1.0 + Cc * S2_22

        # Txi translation = V @ rho
        txi0 = V00 * rho1 + V01 * rho2 + V02 * rho3
        txi1 = V10 * rho1 + V11 * rho2 + V12 * rho3
        txi2 = V20 * rho1 + V21 * rho2 + V22 * rho3

        # ---- translation of T = Txi @ Tg : R @ t_g + t_xi ----
        # Computed and stored FIRST so g/txi/V temporaries die before the
        # nine R@G entries go live (lower peak vreg pressure).
        gx = tg_ref[0, sl, :]
        gy = tg_ref[1, sl, :]
        gz = tg_ref[2, sl, :]
        out_ref[0, sl, :] = R00 * gx + R01 * gy + R02 * gz + txi0
        out_ref[1, sl, :] = R10 * gx + R11 * gy + R12 * gz + txi1
        out_ref[2, sl, :] = R20 * gx + R21 * gy + R22 * gz + txi2

        # ---- quaternion of Tg -> rotation matrix G ----
        qw = tg_ref[3, sl, :]
        qx = tg_ref[4, sl, :]
        qy = tg_ref[5, sl, :]
        qz = tg_ref[6, sl, :]

        qxx = qx * qx
        qyy = qy * qy
        qzz = qz * qz
        qxy = qx * qy
        qxz = qx * qz
        qyz = qy * qz
        qxw = qx * qw
        qyw = qy * qw
        qzw = qz * qw

        G00 = 1.0 - 2.0 * (qyy + qzz)
        G01 = 2.0 * (qxy - qzw)
        G02 = 2.0 * (qxz + qyw)
        G10 = 2.0 * (qxy + qzw)
        G11 = 1.0 - 2.0 * (qxx + qzz)
        G12 = 2.0 * (qyz - qxw)
        G20 = 2.0 * (qxz - qyw)
        G21 = 2.0 * (qyz + qxw)
        G22 = 1.0 - 2.0 * (qxx + qyy)

        # ---- rotation block of T = R @ G ----
        T00 = R00 * G00 + R01 * G10 + R02 * G20
        T01 = R00 * G01 + R01 * G11 + R02 * G21
        T02 = R00 * G02 + R01 * G12 + R02 * G22
        T10 = R10 * G00 + R11 * G10 + R12 * G20
        T11 = R10 * G01 + R11 * G11 + R12 * G21
        T12 = R10 * G02 + R11 * G12 + R12 * G22
        T20 = R20 * G00 + R21 * G10 + R22 * G20
        T21 = R20 * G01 + R21 * G11 + R22 * G21
        T22 = R20 * G02 + R21 * G12 + R22 * G22

        # ---- MtoR7: rotation matrix -> quaternion (vectorized branches) ----
        cond_m22_neg = T22 < 0.0
        cond_m00_gt_m11 = T00 > T11
        cond_m00_lt_negm11 = T00 < -T11

        brA = jnp.logical_and(cond_m22_neg, cond_m00_gt_m11)
        brB = jnp.logical_and(cond_m22_neg, jnp.logical_not(cond_m00_gt_m11))
        brC = jnp.logical_and(jnp.logical_not(cond_m22_neg), cond_m00_lt_negm11)
        # else: brD

        tA = 1.0 + T00 - T11 - T22
        tB = 1.0 - T00 + T11 - T22
        tC = 1.0 - T00 - T11 + T22
        tD = 1.0 + T00 + T11 + T22

        t_sel = jnp.where(brA, tA, jnp.where(brB, tB, jnp.where(brC, tC, tD)))

        q0 = jnp.where(brA, T21 - T12,
             jnp.where(brB, T02 - T20,
             jnp.where(brC, T10 - T01, tD)))
        q1 = jnp.where(brA, tA,
             jnp.where(brB, T01 + T10,
             jnp.where(brC, T20 + T02, T21 - T12)))
        q2 = jnp.where(brA, T01 + T10,
             jnp.where(brB, tB,
             jnp.where(brC, T12 + T21, T02 - T20)))
        q3 = jnp.where(brA, T20 + T02,
             jnp.where(brB, T12 + T21,
             jnp.where(brC, tC, T10 - T01)))

        # scale = 0.5/sqrt(t); sign-flip so q0 >= 0 (scale > 0, so the
        # post-scale sign test of the reference equals testing pre-scale q0).
        scale = 0.5 * lax.rsqrt(t_sel)
        signed_scale = jnp.where(q0 < 0.0, -scale, scale)
        out_ref[3, sl, :] = q0 * signed_scale
        out_ref[4, sl, :] = q1 * signed_scale
        out_ref[5, sl, :] = q2 * signed_scale
        out_ref[6, sl, :] = q3 * signed_scale
        return carry

    lax.fori_loop(0, chunks, chunk_body, 0, unroll=min(4, chunks))


def _choose_tiling(n_chunks):
    """Pick (chunks_per_tile, n_tiles) for a batch of n_chunks 1024-elem chunks."""
    if n_chunks <= 1:
        return 1, 1
    # At least 2 tiles so v7x megacore can shard the grid; target ~32 chunks
    # (32K batch elems, ~5 MiB double-buffered) per tile for large batches.
    n_tiles = max(2, -(-n_chunks // _TARGET_CHUNKS))
    cpt = -(-n_chunks // n_tiles)
    n_tiles = -(-n_chunks // cpt)
    return cpt, n_tiles


def se3_comp(Tg, xi):
    """Tg: (B, 7, 1) float32, xi: (B, 6, 1) float32 -> (B, 7, 1) float32."""
    B = xi.shape[0]
    xi2 = xi[:, :, 0].astype(jnp.float32)    # (B, 6)
    tg2 = Tg[:, :, 0].astype(jnp.float32)    # (B, 7)

    # Adaptive tiling: round the batch to whole compute chunks, then pick a
    # tile size that is big for large batches and minimal for small ones.
    n_chunks = -(-B // _CHUNK_B)
    cpt, n_tiles = _choose_tiling(n_chunks)
    Bp = n_tiles * cpt * _CHUNK_B
    pad = Bp - B
    if pad:
        # Zero padding is benign: zero twist -> identity R/V, zero quaternion
        # -> identity G, so t_sel = 4 > 0 and every lane stays finite.
        xi2 = jnp.pad(xi2, ((0, pad), (0, 0)))
        tg2 = jnp.pad(tg2, ((0, pad), (0, 0)))

    # Component-plane, lane-dense layout: (C, Bp//128, 128)
    # TODO(synk): if the surrounding pipeline can keep xi/Tg/out in this
    # planar layout, these transposes (≈2x the kernel's HBM traffic) vanish.
    n_sub = Bp // _LANES
    xi_planes = jnp.transpose(xi2).reshape(6, n_sub, _LANES)
    tg_planes = jnp.transpose(tg2).reshape(7, n_sub, _LANES)

    tile_sub = cpt * _SUB
    kernel = functools.partial(se3comp_kernel, chunks=cpt)

    out = pl.pallas_call(
        kernel,
        out_shape=jax.ShapeDtypeStruct((7, n_sub, _LANES), jnp.float32),
        grid=(n_tiles,),
        in_specs=[
            pl.BlockSpec((6, tile_sub, _LANES), lambda i: (0, i, 0)),
            pl.BlockSpec((7, tile_sub, _LANES), lambda i: (0, i, 0)),
        ],
        out_specs=pl.BlockSpec((7, tile_sub, _LANES), lambda i: (0, i, 0)),
        compiler_params=pltpu.CompilerParams(
            dimension_semantics=("parallel",)),
    )(xi_planes, tg_planes)

    out_bt = jnp.transpose(out.reshape(7, Bp))[:B]   # (B, 7)
    return out_bt[:, :, None]                        # (B, 7, 1)


def _ref_se3comp(Tg, xi, thr_sq=_THRESHOLD_SQUARE, thr_cu=_THRESHOLD_CUBE):
    """Pure numpy reference mirroring the PyTorch module (per-batch loop)."""
    Tg = np.asarray(Tg, np.float64)
    xi = np.asarray(xi, np.float64)
    B = xi.shape[0]
    out = np.zeros((B, 7, 1), np.float64)
    for b in range(B):
        rho = xi[b, 0:3, 0]
        wx, wy, wz = xi[b, 3:6, 0]
        th2 = wx * wx + wy * wy + wz * wz
        th = np.sqrt(th2)
        th3 = th2 * th
        S = np.array([[0.0, -wz, wy], [wz, 0.0, -wx], [-wy, wx, 0.0]])
        S2 = S @ S
        A = np.sin(th) / th if th > 0 else 0.0
        if th2 > thr_sq:
            Bc = (1.0 - np.cos(th)) / th2
        elif th2 < 1e-6:
            Bc = 0.0
        else:
            Bc = (0.5 + th ** 4 / 720.0 + th ** 8 / 3628800.0
                  - th ** 2 / 24.0 - th ** 6 / 40320.0)
        if th3 > thr_cu:
            Cc = (th - np.sin(th)) / th3
        elif th2 < 1e-6:
            Cc = 0.0
        else:
            Cc = (1.0 / 6.0 + th ** 4 / 5040.0 + th ** 8 / 39916800.0
                  - th ** 2 / 120.0 - th ** 6 / 362880.0)
        R = np.eye(3) + A * S + Bc * S2
        V = np.eye(3) + Bc * S + Cc * S2
        Txi = np.eye(4)
        Txi[0:3, 0:3] = R
        Txi[0:3, 3] = V @ rho
        qw, qx, qy, qz = Tg[b, 3:7, 0]
        G = np.array([
            [1 - 2 * qy * qy - 2 * qz * qz, 2 * qx * qy - 2 * qz * qw, 2 * qx * qz + 2 * qy * qw],
            [2 * qx * qy + 2 * qz * qw, 1 - 2 * qx * qx - 2 * qz * qz, 2 * qy * qz - 2 * qx * qw],
            [2 * qx * qz - 2 * qy * qw, 2 * qy * qz + 2 * qx * qw, 1 - 2 * qx * qx - 2 * qy * qy]])
        Tgm = np.eye(4)
        Tgm[0:3, 0:3] = G
        Tgm[0:3, 3] = Tg[b, 0:3, 0]
        M = Txi @ Tgm
        r7 = np.zeros(7)
        r7[0:3] = M[0:3, 3]
        if M[2, 2] < 0:
            if M[0, 0] > M[1, 1]:
                t = 1 + M[0, 0] - M[1, 1] - M[2, 2]
                q = [M[2, 1] - M[1, 2], t, M[0, 1] + M[1, 0], M[2, 0] + M[0, 2]]
            else:
                t = 1 - M[0, 0] + M[1, 1] - M[2, 2]
                q = [M[0, 2] - M[2, 0], M[0, 1] + M[1, 0], t, M[1, 2] + M[2, 1]]
        elif M[0, 0] < -M[1, 1]:
            t = 1 - M[0, 0] - M[1, 1] + M[2, 2]
            q = [M[1, 0] - M[0, 1], M[2, 0] + M[0, 2], M[1, 2] + M[2, 1], t]
        else:
            t = 1 + M[0, 0] + M[1, 1] + M[2, 2]
            q = [t, M[2, 1] - M[1, 2], M[0, 2] - M[2, 0], M[1, 0] - M[0, 1]]
        q = np.array(q) * (0.5 / np.sqrt(t))
        if q[0] < 0:
            q = -q
        r7[3:7] = q
        out[b, :, 0] = r7
    return out


if __name__ == "__main__":
    B = 8
    key = jax.random.PRNGKey(0)
    k1, k2, k3 = jax.random.split(key, 3)

    # xi: (B, 6, 1) twists; include zero / tiny-angle rows to hit all branches
    xi = 0.5 * jax.random.normal(k1, (B, 6, 1), dtype=jnp.float32)
    xi = xi.at[0, 3:6, 0].set(0.0)                 # theta == 0 branch
    xi = xi.at[1, 3:6, 0].set(jnp.float32(1e-2))   # Taylor-series branch

    # Tg: (B, 7, 1) with a normalized quaternion part
    trans = jax.random.normal(k2, (B, 3, 1), dtype=jnp.float32)
    quat = jax.random.normal(k3, (B, 4, 1), dtype=jnp.float32)
    quat = quat / jnp.linalg.norm(quat, axis=1, keepdims=True)
    Tg = jnp.concatenate([trans, quat], axis=1)

    out = se3_comp(Tg, xi)
    out = jax.block_until_ready(out)

    ref = _ref_se3comp(np.array(Tg), np.array(xi))
    np.testing.assert_allclose(np.array(out), ref, rtol=1e-4, atol=1e-5)

    print("KERNEL_OK")
</pallas_src>

<mosaic_0001>
module attributes {stable_mosaic.version = 11 : i64} {
  func.func @se3comp_kernel(%arg0: i32, %arg1: memref<6x8x128xf32, #tpu.memory_space<vmem>>, %arg2: memref<7x8x128xf32, #tpu.memory_space<vmem>>, %arg3: memref<7x8x128xf32, #tpu.memory_space<vmem>>) attributes {dimension_semantics = [#tpu.dimension_semantics<parallel>], iteration_bounds = array<i64: 1>, scalar_prefetch = 0 : i64, scratch_operands = 0 : i64, tpu.core_type = #tpu.core_type<tc>, window_params = [{transform_indices = @transform_0, window_bounds = array<i64: 6, 8, 128>}, {transform_indices = @transform_1, window_bounds = array<i64: 7, 8, 128>}, {transform_indices = @transform_2, window_bounds = array<i64: 7, 8, 128>}]} {
    %c0_i32 = arith.constant 0 : i32
    %c8_i32 = arith.constant 8 : i32
    %0 = arith.muli %c0_i32, %c8_i32 : i32
    %1 = tpu.assume_multiple %0, 8 : i32
    %c0 = arith.constant 0 : index
    %2 = arith.index_cast %1 : i32 to index
    %c0_0 = arith.constant 0 : index
    %3 = vector.load %arg1[%c0, %2, %c0_0] : memref<6x8x128xf32, #tpu.memory_space<vmem>>, vector<1x8x128xf32>
    %4 = vector.shape_cast %3 : vector<1x8x128xf32> to vector<8x128xf32>
    %c1 = arith.constant 1 : index
    %5 = arith.index_cast %1 : i32 to index
    %c0_1 = arith.constant 0 : index
    %6 = vector.load %arg1[%c1, %5, %c0_1] : memref<6x8x128xf32, #tpu.memory_space<vmem>>, vector<1x8x128xf32>
    %7 = vector.shape_cast %6 : vector<1x8x128xf32> to vector<8x128xf32>
    %c2 = arith.constant 2 : index
    %8 = arith.index_cast %1 : i32 to index
    %c0_2 = arith.constant 0 : index
    %9 = vector.load %arg1[%c2, %8, %c0_2] : memref<6x8x128xf32, #tpu.memory_space<vmem>>, vector<1x8x128xf32>
    %10 = vector.shape_cast %9 : vector<1x8x128xf32> to vector<8x128xf32>
    %c3 = arith.constant 3 : index
    %11 = arith.index_cast %1 : i32 to index
    %c0_3 = arith.constant 0 : index
    %12 = vector.load %arg1[%c3, %11, %c0_3] : memref<6x8x128xf32, #tpu.memory_space<vmem>>, vector<1x8x128xf32>
    %13 = vector.shape_cast %12 : vector<1x8x128xf32> to vector<8x128xf32>
    %c4 = arith.constant 4 : index
    %14 = arith.index_cast %1 : i32 to index
    %c0_4 = arith.constant 0 : index
    %15 = vector.load %arg1[%c4, %14, %c0_4] : memref<6x8x128xf32, #tpu.memory_space<vmem>>, vector<1x8x128xf32>
    %16 = vector.shape_cast %15 : vector<1x8x128xf32> to vector<8x128xf32>
    %c5 = arith.constant 5 : index
    %17 = arith.index_cast %1 : i32 to index
    %c0_5 = arith.constant 0 : index
    %18 = vector.load %arg1[%c5, %17, %c0_5] : memref<6x8x128xf32, #tpu.memory_space<vmem>>, vector<1x8x128xf32>
    %19 = vector.shape_cast %18 : vector<1x8x128xf32> to vector<8x128xf32>
    %20 = arith.mulf %13, %13 : vector<8x128xf32>
    %21 = arith.mulf %16, %16 : vector<8x128xf32>
    %22 = arith.mulf %19, %19 : vector<8x128xf32>
    %23 = arith.mulf %13, %16 : vector<8x128xf32>
    %24 = arith.mulf %13, %19 : vector<8x128xf32>
    %25 = arith.mulf %16, %19 : vector<8x128xf32>
    %26 = arith.addf %20, %21 : vector<8x128xf32>
    %27 = arith.addf %26, %22 : vector<8x128xf32>
    %cst = arith.constant 0.000000e+00 : f32
    %28 = vector.broadcast %cst : f32 to vector<8x128xf32>
    %29 = arith.cmpf ogt, %27, %28 : vector<8x128xf32>
    %cst_6 = arith.constant 1.000000e+00 : f32
    %30 = vector.broadcast %cst_6 : f32 to vector<8x128xf32>
    %31 = arith.select %29, %27, %30 : vector<8x128xi1>, vector<8x128xf32>
    %32 = math.rsqrt %31 : vector<8x128xf32>
    %33 = arith.mulf %27, %32 : vector<8x128xf32>
    %34 = arith.mulf %32, %32 : vector<8x128xf32>
    %35 = arith.mulf %34, %32 : vector<8x128xf32>
    %36 = arith.mulf %27, %33 : vector<8x128xf32>
    %37 = math.sin %33 : vector<8x128xf32>
    %38 = math.cos %33 : vector<8x128xf32>
    %39 = arith.mulf %37, %32 : vector<8x128xf32>
    %cst_7 = arith.constant 0.000000e+00 : f32
    %40 = vector.broadcast %cst_7 : f32 to vector<8x128xf32>
    %41 = arith.select %29, %39, %40 : vector<8x128xi1>, vector<8x128xf32>
    %cst_8 = arith.constant 1.000000e+00 : f32
    %42 = vector.broadcast %cst_8 : f32 to vector<8x128xf32>
    %43 = arith.subf %42, %38 : vector<8x128xf32>
    %44 = arith.mulf %43, %34 : vector<8x128xf32>
    %cst_9 = arith.constant 2.755732E-7 : f32
    %45 = vector.broadcast %cst_9 : f32 to vector<8x128xf32>
    %46 = arith.mulf %27, %45 : vector<8x128xf32>
    %cst_10 = arith.constant -2.48015876E-5 : f32
    %47 = vector.broadcast %cst_10 : f32 to vector<8x128xf32>
    %48 = arith.addf %47, %46 : vector<8x128xf32>
    %49 = arith.mulf %27, %48 : vector<8x128xf32>
    %cst_11 = arith.constant 0.00138888892 : f32
    %50 = vector.broadcast %cst_11 : f32 to vector<8x128xf32>
    %51 = arith.addf %50, %49 : vector<8x128xf32>
    %52 = arith.mulf %27, %51 : vector<8x128xf32>
    %cst_12 = arith.constant -0.0416666679 : f32
    %53 = vector.broadcast %cst_12 : f32 to vector<8x128xf32>
    %54 = arith.addf %53, %52 : vector<8x128xf32>
    %55 = arith.mulf %27, %54 : vector<8x128xf32>
    %cst_13 = arith.constant 5.000000e-01 : f32
    %56 = vector.broadcast %cst_13 : f32 to vector<8x128xf32>
    %57 = arith.addf %56, %55 : vector<8x128xf32>
    %cst_14 = arith.constant 1.000000e-01 : f32
    %58 = vector.broadcast %cst_14 : f32 to vector<8x128xf32>
    %59 = arith.cmpf ogt, %27, %58 : vector<8x128xf32>
    %cst_15 = arith.constant 9.99999997E-7 : f32
    %60 = vector.broadcast %cst_15 : f32 to vector<8x128xf32>
    %61 = arith.cmpf olt, %27, %60 : vector<8x128xf32>
    %cst_16 = arith.constant 0.000000e+00 : f32
    %62 = vector.broadcast %cst_16 : f32 to vector<8x128xf32>
    %63 = arith.select %61, %62, %57 : vector<8x128xi1>, vector<8x128xf32>
    %64 = arith.select %59, %44, %63 : vector<8x128xi1>, vector<8x128xf32>
    %65 = arith.subf %33, %37 : vector<8x128xf32>
    %66 = arith.mulf %65, %35 : vector<8x128xf32>
    %cst_17 = arith.constant 2.50521079E-8 : f32
    %67 = vector.broadcast %cst_17 : f32 to vector<8x128xf32>
    %68 = arith.mulf %27, %67 : vector<8x128xf32>
    %cst_18 = arith.constant -2.75573188E-6 : f32
    %69 = vector.broadcast %cst_18 : f32 to vector<8x128xf32>
    %70 = arith.addf %69, %68 : vector<8x128xf32>
    %71 = arith.mulf %27, %70 : vector<8x128xf32>
    %cst_19 = arith.constant 1.98412701E-4 : f32
    %72 = vector.broadcast %cst_19 : f32 to vector<8x128xf32>
    %73 = arith.addf %72, %71 : vector<8x128xf32>
    %74 = arith.mulf %27, %73 : vector<8x128xf32>
    %cst_20 = arith.constant -0.00833333377 : f32
    %75 = vector.broadcast %cst_20 : f32 to vector<8x128xf32>
    %76 = arith.addf %75, %74 : vector<8x128xf32>
    %77 = arith.mulf %27, %76 : vector<8x128xf32>
    %cst_21 = arith.constant 0.166666672 : f32
    %78 = vector.broadcast %cst_21 : f32 to vector<8x128xf32>
    %79 = arith.addf %78, %77 : vector<8x128xf32>
    %cst_22 = arith.constant 1.000000e-01 : f32
    %80 = vector.broadcast %cst_22 : f32 to vector<8x128xf32>
    %81 = arith.cmpf ogt, %36, %80 : vector<8x128xf32>
    %cst_23 = arith.constant 9.99999997E-7 : f32
    %82 = vector.broadcast %cst_23 : f32 to vector<8x128xf32>
    %83 = arith.cmpf olt, %27, %82 : vector<8x128xf32>
    %cst_24 = arith.constant 0.000000e+00 : f32
    %84 = vector.broadcast %cst_24 : f32 to vector<8x128xf32>
    %85 = arith.select %83, %84, %79 : vector<8x128xi1>, vector<8x128xf32>
    %86 = arith.select %81, %66, %85 : vector<8x128xi1>, vector<8x128xf32>
    %87 = arith.addf %21, %22 : vector<8x128xf32>
    %cst_25 = arith.constant 0.000000e+00 : f32
    %88 = vector.broadcast %cst_25 : f32 to vector<8x128xf32>
    %89 = arith.subf %88, %87 : vector<8x128xf32>
    %90 = arith.addf %20, %22 : vector<8x128xf32>
    %cst_26 = arith.constant 0.000000e+00 : f32
    %91 = vector.broadcast %cst_26 : f32 to vector<8x128xf32>
    %92 = arith.subf %91, %90 : vector<8x128xf32>
    %93 = arith.addf %20, %21 : vector<8x128xf32>
    %cst_27 = arith.constant 0.000000e+00 : f32
    %94 = vector.broadcast %cst_27 : f32 to vector<8x128xf32>
    %95 = arith.subf %94, %93 : vector<8x128xf32>
    %96 = arith.mulf %41, %13 : vector<8x128xf32>
    %97 = arith.mulf %41, %16 : vector<8x128xf32>
    %98 = arith.mulf %41, %19 : vector<8x128xf32>
    %99 = arith.mulf %64, %23 : vector<8x128xf32>
    %100 = arith.mulf %64, %24 : vector<8x128xf32>
    %101 = arith.mulf %64, %25 : vector<8x128xf32>
    %102 = arith.mulf %64, %13 : vector<8x128xf32>
    %103 = arith.mulf %64, %16 : vector<8x128xf32>
    %104 = arith.mulf %64, %19 : vector<8x128xf32>
    %105 = arith.mulf %86, %23 : vector<8x128xf32>
    %106 = arith.mulf %86, %24 : vector<8x128xf32>
    %107 = arith.mulf %86, %25 : vector<8x128xf32>
    %108 = arith.mulf %64, %89 : vector<8x128xf32>
    %cst_28 = arith.constant 1.000000e+00 : f32
    %109 = vector.broadcast %cst_28 : f32 to vector<8x128xf32>
    %110 = arith.addf %109, %108 : vector<8x128xf32>
    %111 = arith.subf %99, %98 : vector<8x128xf32>
    %112 = arith.addf %100, %97 : vector<8x128xf32>
    %113 = arith.addf %99, %98 : vector<8x128xf32>
    %114 = arith.mulf %64, %92 : vector<8x128xf32>
    %cst_29 = arith.constant 1.000000e+00 : f32
    %115 = vector.broadcast %cst_29 : f32 to vector<8x128xf32>
    %116 = arith.addf %115, %114 : vector<8x128xf32>
    %117 = arith.subf %101, %96 : vector<8x128xf32>
    %118 = arith.subf %100, %97 : vector<8x128xf32>
    %119 = arith.addf %101, %96 : vector<8x128xf32>
    %120 = arith.mulf %64, %95 : vector<8x128xf32>
    %cst_30 = arith.constant 1.000000e+00 : f32
    %121 = vector.broadcast %cst_30 : f32 to vector<8x128xf32>
    %122 = arith.addf %121, %120 : vector<8x128xf32>
    %123 = arith.mulf %86, %89 : vector<8x128xf32>
    %cst_31 = arith.constant 1.000000e+00 : f32
    %124 = vector.broadcast %cst_31 : f32 to vector<8x128xf32>
    %125 = arith.addf %124, %123 : vector<8x128xf32>
    %126 = arith.subf %105, %104 : vector<8x128xf32>
    %127 = arith.addf %106, %103 : vector<8x128xf32>
    %128 = arith.addf %105, %104 : vector<8x128xf32>
    %129 = arith.mulf %86, %92 : vector<8x128xf32>
    %cst_32 = arith.constant 1.000000e+00 : f32
    %130 = vector.broadcast %cst_32 : f32 to vector<8x128xf32>
    %131 = arith.addf %130, %129 : vector<8x128xf32>
    %132 = arith.subf %107, %102 : vector<8x128xf32>
    %133 = arith.subf %106, %103 : vector<8x128xf32>
    %134 = arith.addf %107, %102 : vector<8x128xf32>
    %135 = arith.mulf %86, %95 : vector<8x128xf32>
    %cst_33 = arith.constant 1.000000e+00 : f32
    %136 = vector.broadcast %cst_33 : f32 to vector<8x128xf32>
    %137 = arith.addf %136, %135 : vector<8x128xf32>
    %138 = arith.mulf %125, %4 : vector<8x128xf32>
    %139 = arith.mulf %126, %7 : vector<8x128xf32>
    %140 = arith.addf %138, %139 : vector<8x128xf32>
    %141 = arith.mulf %127, %10 : vector<8x128xf32>
    %142 = arith.addf %140, %141 : vector<8x128xf32>
    %143 = arith.mulf %128, %4 : vector<8x128xf32>
    %144 = arith.mulf %131, %7 : vector<8x128xf32>
    %145 = arith.addf %143, %144 : vector<8x128xf32>
    %146 = arith.mulf %132, %10 : vector<8x128xf32>
    %147 = arith.addf %145, %146 : vector<8x128xf32>
    %148 = arith.mulf %133, %4 : vector<8x128xf32>
    %149 = arith.mulf %134, %7 : vector<8x128xf32>
    %150 = arith.addf %148, %149 : vector<8x128xf32>
    %151 = arith.mulf %137, %10 : vector<8x128xf32>
    %152 = arith.addf %150, %151 : vector<8x128xf32>
    %c0_34 = arith.constant 0 : index
    %153 = arith.index_cast %1 : i32 to index
    %c0_35 = arith.constant 0 : index
    %154 = vector.load %arg2[%c0_34, %153, %c0_35] : memref<7x8x128xf32, #tpu.memory_space<vmem>>, vector<1x8x128xf32>
    %155 = vector.shape_cast %154 : vector<1x8x128xf32> to vector<8x128xf32>
    %c1_36 = arith.constant 1 : index
    %156 = arith.index_cast %1 : i32 to index
    %c0_37 = arith.constant 0 : index
    %157 = vector.load %arg2[%c1_36, %156, %c0_37] : memref<7x8x128xf32, #tpu.memory_space<vmem>>, vector<1x8x128xf32>
    %158 = vector.shape_cast %157 : vector<1x8x128xf32> to vector<8x128xf32>
    %c2_38 = arith.constant 2 : index
    %159 = arith.index_cast %1 : i32 to index
    %c0_39 = arith.constant 0 : index
    %160 = vector.load %arg2[%c2_38, %159, %c0_39] : memref<7x8x128xf32, #tpu.memory_space<vmem>>, vector<1x8x128xf32>
    %161 = vector.shape_cast %160 : vector<1x8x128xf32> to vector<8x128xf32>
    %162 = arith.mulf %110, %155 : vector<8x128xf32>
    %163 = arith.mulf %111, %158 : vector<8x128xf32>
    %164 = arith.addf %162, %163 : vector<8x128xf32>
    %165 = arith.mulf %112, %161 : vector<8x128xf32>
    %166 = arith.addf %164, %165 : vector<8x128xf32>
    %167 = arith.addf %166, %142 : vector<8x128xf32>
    %c0_40 = arith.constant 0 : index
    %168 = arith.index_cast %1 : i32 to index
    %c0_41 = arith.constant 0 : index
    %169 = vector.load %arg3[%c0_40, %168, %c0_41] : memref<7x8x128xf32, #tpu.memory_space<vmem>>, vector<1x8x128xf32>
    %170 = vector.shape_cast %169 : vector<1x8x128xf32> to vector<8x128xf32>
    %171 = vector.shape_cast %167 : vector<8x128xf32> to vector<1x8x128xf32>
    tpu.vector_store %arg3[%c0_40, %168, %c0_41], %171 {strides = array<i32>} : memref<7x8x128xf32, #tpu.memory_space<vmem>>, vector<1x8x128xf32>,
    %172 = arith.mulf %113, %155 : vector<8x128xf32>
    %173 = arith.mulf %116, %158 : vector<8x128xf32>
    %174 = arith.addf %172, %173 : vector<8x128xf32>
    %175 = arith.mulf %117, %161 : vector<8x128xf32>
    %176 = arith.addf %174, %175 : vector<8x128xf32>
    %177 = arith.addf %176, %147 : vector<8x128xf32>
    %c1_42 = arith.constant 1 : index
    %178 = arith.index_cast %1 : i32 to index
    %c0_43 = arith.constant 0 : index
    %179 = vector.load %arg3[%c1_42, %178, %c0_43] : memref<7x8x128xf32, #tpu.memory_space<vmem>>, vector<1x8x128xf32>
    %180 = vector.shape_cast %179 : vector<1x8x128xf32> to vector<8x128xf32>
    %181 = vector.shape_cast %177 : vector<8x128xf32> to vector<1x8x128xf32>
    tpu.vector_store %arg3[%c1_42, %178, %c0_43], %181 {strides = array<i32>} : memref<7x8x128xf32, #tpu.memory_space<vmem>>, vector<1x8x128xf32>,
    %182 = arith.mulf %118, %155 : vector<8x128xf32>
    %183 = arith.mulf %119, %158 : vector<8x128xf32>
    %184 = arith.addf %182, %183 : vector<8x128xf32>
    %185 = arith.mulf %122, %161 : vector<8x128xf32>
    %186 = arith.addf %184, %185 : vector<8x128xf32>
    %187 = arith.addf %186, %152 : vector<8x128xf32>
    %c2_44 = arith.constant 2 : index
    %188 = arith.index_cast %1 : i32 to index
    %c0_45 = arith.constant 0 : index
    %189 = vector.load %arg3[%c2_44, %188, %c0_45] : memref<7x8x128xf32, #tpu.memory_space<vmem>>, vector<1x8x128xf32>
    %190 = vector.shape_cast %189 : vector<1x8x128xf32> to vector<8x128xf32>
    %191 = vector.shape_cast %187 : vector<8x128xf32> to vector<1x8x128xf32>
    tpu.vector_store %arg3[%c2_44, %188, %c0_45], %191 {strides = array<i32>} : memref<7x8x128xf32, #tpu.memory_space<vmem>>, vector<1x8x128xf32>,
    %c3_46 = arith.constant 3 : index
    %192 = arith.index_cast %1 : i32 to index
    %c0_47 = arith.constant 0 : index
    %193 = vector.load %arg2[%c3_46, %192, %c0_47] : memref<7x8x128xf32, #tpu.memory_space<vmem>>, vector<1x8x128xf32>
    %194 = vector.shape_cast %193 : vector<1x8x128xf32> to vector<8x128xf32>
    %c4_48 = arith.constant 4 : index
    %195 = arith.index_cast %1 : i32 to index
    %c0_49 = arith.constant 0 : index
    %196 = vector.load %arg2[%c4_48, %195, %c0_49] : memref<7x8x128xf32, #tpu.memory_space<vmem>>, vector<1x8x128xf32>
    %197 = vector.shape_cast %196 : vector<1x8x128xf32> to vector<8x128xf32>
    %c5_50 = arith.constant 5 : index
    %198 = arith.index_cast %1 : i32 to index
    %c0_51 = arith.constant 0 : index
    %199 = vector.load %arg2[%c5_50, %198, %c0_51] : memref<7x8x128xf32, #tpu.memory_space<vmem>>, vector<1x8x128xf32>
    %200 = vector.shape_cast %199 : vector<1x8x128xf32> to vector<8x128xf32>
    %c6 = arith.constant 6 : index
    %201 = arith.index_cast %1 : i32 to index
    %c0_52 = arith.constant 0 : index
    %202 = vector.load %arg2[%c6, %201, %c0_52] : memref<7x8x128xf32, #tpu.memory_space<vmem>>, vector<1x8x128xf32>
    %203 = vector.shape_cast %202 : vector<1x8x128xf32> to vector<8x128xf32>
    %204 = arith.mulf %197, %197 : vector<8x128xf32>
    %205 = arith.mulf %200, %200 : vector<8x128xf32>
    %206 = arith.mulf %203, %203 : vector<8x128xf32>
    %207 = arith.mulf %197, %200 : vector<8x128xf32>
    %208 = arith.mulf %197, %203 : vector<8x128xf32>
    %209 = arith.mulf %200, %203 : vector<8x128xf32>
    %210 = arith.mulf %197, %194 : vector<8x128xf32>
    %211 = arith.mulf %200, %194 : vector<8x128xf32>
    %212 = arith.mulf %203, %194 : vector<8x128xf32>
    %213 = arith.addf %205, %206 : vector<8x128xf32>
    %cst_53 = arith.constant 2.000000e+00 : f32
    %214 = vector.broadcast %cst_53 : f32 to vector<8x128xf32>
    %215 = arith.mulf %214, %213 : vector<8x128xf32>
    %cst_54 = arith.constant 1.000000e+00 : f32
    %216 = vector.broadcast %cst_54 : f32 to vector<8x128xf32>
    %217 = arith.subf %216, %215 : vector<8x128xf32>
    %218 = arith.subf %207, %212 : vector<8x128xf32>
    %cst_55 = arith.constant 2.000000e+00 : f32
    %219 = vector.broadcast %cst_55 : f32 to vector<8x128xf32>
    %220 = arith.mulf %219, %218 : vector<8x128xf32>
    %221 = arith.addf %208, %211 : vector<8x128xf32>
    %cst_56 = arith.constant 2.000000e+00 : f32
    %222 = vector.broadcast %cst_56 : f32 to vector<8x128xf32>
    %223 = arith.mulf %222, %221 : vector<8x128xf32>
    %224 = arith.addf %207, %212 : vector<8x128xf32>
    %cst_57 = arith.constant 2.000000e+00 : f32
    %225 = vector.broadcast %cst_57 : f32 to vector<8x128xf32>
    %226 = arith.mulf %225, %224 : vector<8x128xf32>
    %227 = arith.addf %204, %206 : vector<8x128xf32>
    %cst_58 = arith.constant 2.000000e+00 : f32
    %228 = vector.broadcast %cst_58 : f32 to vector<8x128xf32>
    %229 = arith.mulf %228, %227 : vector<8x128xf32>
    %cst_59 = arith.constant 1.000000e+00 : f32
    %230 = vector.broadcast %cst_59 : f32 to vector<8x128xf32>
    %231 = arith.subf %230, %229 : vector<8x128xf32>
    %232 = arith.subf %209, %210 : vector<8x128xf32>
    %cst_60 = arith.constant 2.000000e+00 : f32
    %233 = vector.broadcast %cst_60 : f32 to vector<8x128xf32>
    %234 = arith.mulf %233, %232 : vector<8x128xf32>
    %235 = arith.subf %208, %211 : vector<8x128xf32>
    %cst_61 = arith.constant 2.000000e+00 : f32
    %236 = vector.broadcast %cst_61 : f32 to vector<8x128xf32>
    %237 = arith.mulf %236, %235 : vector<8x128xf32>
    %238 = arith.addf %209, %210 : vector<8x128xf32>
    %cst_62 = arith.constant 2.000000e+00 : f32
    %239 = vector.broadcast %cst_62 : f32 to vector<8x128xf32>
    %240 = arith.mulf %239, %238 : vector<8x128xf32>
    %241 = arith.addf %204, %205 : vector<8x128xf32>
    %cst_63 = arith.constant 2.000000e+00 : f32
    %242 = vector.broadcast %cst_63 : f32 to vector<8x128xf32>
    %243 = arith.mulf %242, %241 : vector<8x128xf32>
    %cst_64 = arith.constant 1.000000e+00 : f32
    %244 = vector.broadcast %cst_64 : f32 to vector<8x128xf32>
    %245 = arith.subf %244, %243 : vector<8x128xf32>
    %246 = arith.mulf %110, %217 : vector<8x128xf32>
    %247 = arith.mulf %111, %226 : vector<8x128xf32>
    %248 = arith.addf %246, %247 : vector<8x128xf32>
    %249 = arith.mulf %112, %237 : vector<8x128xf32>
    %250 = arith.addf %248, %249 : vector<8x128xf32>
    %251 = arith.mulf %110, %220 : vector<8x128xf32>
    %252 = arith.mulf %111, %231 : vector<8x128xf32>
    %253 = arith.addf %251, %252 : vector<8x128xf32>
    %254 = arith.mulf %112, %240 : vector<8x128xf32>
    %255 = arith.addf %253, %254 : vector<8x128xf32>
    %256 = arith.mulf %110, %223 : vector<8x128xf32>
    %257 = arith.mulf %111, %234 : vector<8x128xf32>
    %258 = arith.addf %256, %257 : vector<8x128xf32>
    %259 = arith.mulf %112, %245 : vector<8x128xf32>
    %260 = arith.addf %258, %259 : vector<8x128xf32>
    %261 = arith.mulf %113, %217 : vector<8x128xf32>
    %262 = arith.mulf %116, %226 : vector<8x128xf32>
    %263 = arith.addf %261, %262 : vector<8x128xf32>
    %264 = arith.mulf %117, %237 : vector<8x128xf32>
    %265 = arith.addf %263, %264 : vector<8x128xf32>
    %266 = arith.mulf %113, %220 : vector<8x128xf32>
    %267 = arith.mulf %116, %231 : vector<8x128xf32>
    %268 = arith.addf %266, %267 : vector<8x128xf32>
    %269 = arith.mulf %117, %240 : vector<8x128xf32>
    %270 = arith.addf %268, %269 : vector<8x128xf32>
    %271 = arith.mulf %113, %223 : vector<8x128xf32>
    %272 = arith.mulf %116, %234 : vector<8x128xf32>
    %273 = arith.addf %271, %272 : vector<8x128xf32>
    %274 = arith.mulf %117, %245 : vector<8x128xf32>
    %275 = arith.addf %273, %274 : vector<8x128xf32>
    %276 = arith.mulf %118, %217 : vector<8x128xf32>
    %277 = arith.mulf %119, %226 : vector<8x128xf32>
    %278 = arith.addf %276, %277 : vector<8x128xf32>
    %279 = arith.mulf %122, %237 : vector<8x128xf32>
    %280 = arith.addf %278, %279 : vector<8x128xf32>
    %281 = arith.mulf %118, %220 : vector<8x128xf32>
    %282 = arith.mulf %119, %231 : vector<8x128xf32>
    %283 = arith.addf %281, %282 : vector<8x128xf32>
    %284 = arith.mulf %122, %240 : vector<8x128xf32>
    %285 = arith.addf %283, %284 : vector<8x128xf32>
    %286 = arith.mulf %118, %223 : vector<8x128xf32>
    %287 = arith.mulf %119, %234 : vector<8x128xf32>
    %288 = arith.addf %286, %287 : vector<8x128xf32>
    %289 = arith.mulf %122, %245 : vector<8x128xf32>
    %290 = arith.addf %288, %289 : vector<8x128xf32>
    %cst_65 = arith.constant 0.000000e+00 : f32
    %291 = vector.broadcast %cst_65 : f32 to vector<8x128xf32>
    %292 = arith.cmpf olt, %290, %291 : vector<8x128xf32>
    %293 = arith.cmpf ogt, %250, %270 : vector<8x128xf32>
    %cst_66 = arith.constant 0.000000e+00 : f32
    %294 = vector.broadcast %cst_66 : f32 to vector<8x128xf32>
    %295 = arith.subf %294, %270 : vector<8x128xf32>
    %296 = arith.cmpf olt, %250, %295 : vector<8x128xf32>
    %297 = arith.andi %292, %293 : vector<8x128xi1>
    %cst_67 = arith.constant dense<true> : vector<8x128xi1>
    %298 = arith.xori %293, %cst_67 : vector<8x128xi1>
    %299 = arith.andi %292, %298 : vector<8x128xi1>
    %cst_68 = arith.constant dense<true> : vector<8x128xi1>
    %300 = arith.xori %292, %cst_68 : vector<8x128xi1>
    %301 = arith.andi %300, %296 : vector<8x128xi1>
    %cst_69 = arith.constant 1.000000e+00 : f32
    %302 = vector.broadcast %cst_69 : f32 to vector<8x128xf32>
    %303 = arith.addf %302, %250 : vector<8x128xf32>
    %304 = arith.subf %303, %270 : vector<8x128xf32>
    %305 = arith.subf %304, %290 : vector<8x128xf32>
    %cst_70 = arith.constant 1.000000e+00 : f32
    %306 = vector.broadcast %cst_70 : f32 to vector<8x128xf32>
    %307 = arith.subf %306, %250 : vector<8x128xf32>
    %308 = arith.addf %307, %270 : vector<8x128xf32>
    %309 = arith.subf %308, %290 : vector<8x128xf32>
    %cst_71 = arith.constant 1.000000e+00 : f32
    %310 = vector.broadcast %cst_71 : f32 to vector<8x128xf32>
    %311 = arith.subf %310, %250 : vector<8x128xf32>
    %312 = arith.subf %311, %270 : vector<8x128xf32>
    %313 = arith.addf %312, %290 : vector<8x128xf32>
    %cst_72 = arith.constant 1.000000e+00 : f32
    %314 = vector.broadcast %cst_72 : f32 to vector<8x128xf32>
    %315 = arith.addf %314, %250 : vector<8x128xf32>
    %316 = arith.addf %315, %270 : vector<8x128xf32>
    %317 = arith.addf %316, %290 : vector<8x128xf32>
    %318 = arith.select %301, %313, %317 : vector<8x128xi1>, vector<8x128xf32>
    %319 = arith.select %299, %309, %318 : vector<8x128xi1>, vector<8x128xf32>
    %320 = arith.select %297, %305, %319 : vector<8x128xi1>, vector<8x128xf32>
    %321 = arith.subf %285, %275 : vector<8x128xf32>
    %322 = arith.subf %260, %280 : vector<8x128xf32>
    %323 = arith.subf %265, %255 : vector<8x128xf32>
    %324 = arith.select %301, %323, %317 : vector<8x128xi1>, vector<8x128xf32>
    %325 = arith.select %299, %322, %324 : vector<8x128xi1>, vector<8x128xf32>
    %326 = arith.select %297, %321, %325 : vector<8x128xi1>, vector<8x128xf32>
    %327 = arith.addf %255, %265 : vector<8x128xf32>
    %328 = arith.addf %280, %260 : vector<8x128xf32>
    %329 = arith.subf %285, %275 : vector<8x128xf32>
    %330 = arith.select %301, %328, %329 : vector<8x128xi1>, vector<8x128xf32>
    %331 = arith.select %299, %327, %330 : vector<8x128xi1>, vector<8x128xf32>
    %332 = arith.select %297, %305, %331 : vector<8x128xi1>, vector<8x128xf32>
    %333 = arith.addf %255, %265 : vector<8x128xf32>
    %334 = arith.addf %275, %285 : vector<8x128xf32>
    %335 = arith.subf %260, %280 : vector<8x128xf32>
    %336 = arith.select %301, %334, %335 : vector<8x128xi1>, vector<8x128xf32>
    %337 = arith.select %299, %309, %336 : vector<8x128xi1>, vector<8x128xf32>
    %338 = arith.select %297, %333, %337 : vector<8x128xi1>, vector<8x128xf32>
    %339 = arith.addf %280, %260 : vector<8x128xf32>
    %340 = arith.addf %275, %285 : vector<8x128xf32>
    %341 = arith.subf %265, %255 : vector<8x128xf32>
    %342 = arith.select %301, %313, %341 : vector<8x128xi1>, vector<8x128xf32>
    %343 = arith.select %299, %340, %342 : vector<8x128xi1>, vector<8x128xf32>
    %344 = arith.select %297, %339, %343 : vector<8x128xi1>, vector<8x128xf32>
    %345 = math.rsqrt %320 : vector<8x128xf32>
    %cst_73 = arith.constant 5.000000e-01 : f32
    %346 = vector.broadcast %cst_73 : f32 to vector<8x128xf32>
    %347 = arith.mulf %346, %345 : vector<8x128xf32>
    %cst_74 = arith.constant 0.000000e+00 : f32
    %348 = vector.broadcast %cst_74 : f32 to vector<8x128xf32>
    %349 = arith.cmpf olt, %326, %348 : vector<8x128xf32>
    %cst_75 = arith.constant 0.000000e+00 : f32
    %350 = vector.broadcast %cst_75 : f32 to vector<8x128xf32>
    %351 = arith.subf %350, %347 : vector<8x128xf32>
    %352 = arith.select %349, %351, %347 : vector<8x128xi1>, vector<8x128xf32>
    %353 = arith.mulf %326, %352 : vector<8x128xf32>
    %c3_76 = arith.constant 3 : index
    %354 = arith.index_cast %1 : i32 to index
    %c0_77 = arith.constant 0 : index
    %355 = vector.load %arg3[%c3_76, %354, %c0_77] : memref<7x8x128xf32, #tpu.memory_space<vmem>>, vector<1x8x128xf32>
    %356 = vector.shape_cast %355 : vector<1x8x128xf32> to vector<8x128xf32>
    %357 = vector.shape_cast %353 : vector<8x128xf32> to vector<1x8x128xf32>
    tpu.vector_store %arg3[%c3_76, %354, %c0_77], %357 {strides = array<i32>} : memref<7x8x128xf32, #tpu.memory_space<vmem>>, vector<1x8x128xf32>,
    %358 = arith.mulf %332, %352 : vector<8x128xf32>
    %c4_78 = arith.constant 4 : index
    %359 = arith.index_cast %1 : i32 to index
    %c0_79 = arith.constant 0 : index
    %360 = vector.load %arg3[%c4_78, %359, %c0_79] : memref<7x8x128xf32, #tpu.memory_space<vmem>>, vector<1x8x128xf32>
    %361 = vector.shape_cast %360 : vector<1x8x128xf32> to vector<8x128xf32>
    %362 = vector.shape_cast %358 : vector<8x128xf32> to vector<1x8x128xf32>
    tpu.vector_store %arg3[%c4_78, %359, %c0_79], %362 {strides = array<i32>} : memref<7x8x128xf32, #tpu.memory_space<vmem>>, vector<1x8x128xf32>,
    %363 = arith.mulf %338, %352 : vector<8x128xf32>
    %c5_80 = arith.constant 5 : index
    %364 = arith.index_cast %1 : i32 to index
    %c0_81 = arith.constant 0 : index
    %365 = vector.load %arg3[%c5_80, %364, %c0_81] : memref<7x8x128xf32, #tpu.memory_space<vmem>>, vector<1x8x128xf32>
    %366 = vector.shape_cast %365 : vector<1x8x128xf32> to vector<8x128xf32>
    %367 = vector.shape_cast %363 : vector<8x128xf32> to vector<1x8x128xf32>
    tpu.vector_store %arg3[%c5_80, %364, %c0_81], %367 {strides = array<i32>} : memref<7x8x128xf32, #tpu.memory_space<vmem>>, vector<1x8x128xf32>,
    %368 = arith.mulf %344, %352 : vector<8x128xf32>
    %c6_82 = arith.constant 6 : index
    %369 = arith.index_cast %1 : i32 to index
    %c0_83 = arith.constant 0 : index
    %370 = vector.load %arg3[%c6_82, %369, %c0_83] : memref<7x8x128xf32, #tpu.memory_space<vmem>>, vector<1x8x128xf32>
    %371 = vector.shape_cast %370 : vector<1x8x128xf32> to vector<8x128xf32>
    %372 = vector.shape_cast %368 : vector<8x128xf32> to vector<1x8x128xf32>
    tpu.vector_store %arg3[%c6_82, %369, %c0_83], %372 {strides = array<i32>} : memref<7x8x128xf32, #tpu.memory_space<vmem>>, vector<1x8x128xf32>,
    %c1_i32 = arith.constant 1 : i32
    return
  }
  func.func @transform_0(%arg0: i32) -> (i32, i32, i32) {
    %c0_i32 = arith.constant 0 : i32
    %c0_i32_0 = arith.constant 0 : i32
    %c0_i32_1 = arith.constant 0 : i32
    return %c0_i32, %arg0, %c0_i32_0 : i32, i32, i32
  }
  func.func @transform_1(%arg0: i32) -> (i32, i32, i32) {
    %c0_i32 = arith.constant 0 : i32
    %c0_i32_0 = arith.constant 0 : i32
    %c0_i32_1 = arith.constant 0 : i32
    return %c0_i32, %arg0, %c0_i32_0 : i32, i32, i32
  }
  func.func @transform_2(%arg0: i32) -> (i32, i32, i32) {
    %c0_i32 = arith.constant 0 : i32
    %c0_i32_0 = arith.constant 0 : i32
    %c0_i32_1 = arith.constant 0 : i32
    return %c0_i32, %arg0, %c0_i32_0 : i32, i32, i32
  }
}

</mosaic_0001>

<llo_original>
// kernel: tpu_custom_call.1
$region0: #{tpu_custom_call.1}
  #allocation0 [shape = 'u32[]', space=smem, size = 0x4, offset = 0x4, fixed_abs, tag = 'smem constant byte address 0x4 - core index']
  #allocation1 [shape = 'u32[144,128]{1,0:T(1,128)}', space=vmem, size = 0x12000, scoped, tag = 'internal scratch']
  %s0 = inlined_call_operand.hbm [shape: f32[6,8,128], index: 0, kind: input, shape index: {}]
  %s1 = inlined_call_operand.hbm [shape: f32[7,8,128], index: 1, kind: input, shape index: {}]
  %s2 = inlined_call_operand.hbm [shape: f32[7,8,128], index: 2, kind: output, shape index: {}]
  %s3 = sld [smem:[#allocation0]]
  $region26: #{tpu_custom_call.1} parent=0
    _
  %s5 = ssub.s32 1, %s3
  %s6 = scalar_select 0, %s5, %s3
  $region1: #{tpu_custom_call.1} parent=0
    #allocation2 [shape = 'u8[24576]{0}', space=vmem, size = 0x6000, scoped, tag = 'input window, operand 0, single buffered']
    #allocation3 [shape = 's32[1]{0}', space=sflag, size = 0x4, scoped, tag = 'scoped memory for tpu_custom_call.1']
    #allocation4 [shape = 's32[1]{0}', space=sflag, size = 0x4, scoped, tag = 'scoped memory for tpu_custom_call.1']
    #allocation5 [shape = 'u8[28672]{0}', space=vmem, size = 0x7000, scoped, tag = 'input window, operand 1, single buffered']
    #allocation6 [shape = 's32[1]{0}', space=sflag, size = 0x4, scoped, tag = 'scoped memory for tpu_custom_call.1']
    #allocation7 [shape = 'u8[28672]{0}', space=vmem, size = 0x7000, scoped, tag = 'output window, operand 0, single buffered']
    %7 = vsyncpa [#allocation3], 0
    %8 = vsyncpa [#allocation6], 0
    %9 = vsyncpa [#allocation4], 0
    // Predicated region
    $region2: #{tpu_custom_call.1} parent=1 // pred_check
      _
    $region3: #{tpu_custom_call.1} parent=1 // pred_check_branch
      %11 = sbr.rel (0) target = $region5
    $region4: #{tpu_custom_call.1} parent=1 // pred_region
      %s13 = ssub.s32 768, 768
      %14 = vsyncadd [#allocation3], %s13
      %s15 = sshll.u32 [#allocation2], 4
      %s16 = int_to_ptr.vmem [resolvable:$true] %s15
      %21 = dma.hbm_to_vmem [thread:$0]  %s0, 768, %s16, [#allocation3], 128, 128, 8
    $region5: #{tpu_custom_call.1} parent=1 // pred_fallthru
      _
    // Predicated region
    $region6: #{tpu_custom_call.1} parent=1 // pred_check
      _
    $region7: #{tpu_custom_call.1} parent=1 // pred_check_branch
      %23 = sbr.rel (0) target = $region9
    $region8: #{tpu_custom_call.1} parent=1 // pred_region
      %s25 = ssub.s32 896, 896
      %26 = vsyncadd [#allocation6], %s25
      %s27 = sshll.u32 [#allocation5], 4
      %s28 = int_to_ptr.vmem [resolvable:$true] %s27
      %33 = dma.hbm_to_vmem [thread:$0]  %s1, 896, %s28, [#allocation6], 128, 128, 8
    $region9: #{tpu_custom_call.1} parent=1 // pred_fallthru
      _
    // Predicated region
    $region10: #{tpu_custom_call.1} parent=1 // pred_check
      _
    $region11: #{tpu_custom_call.1} parent=1 // pred_check_branch
      %35 = sbr.rel (0) target = $region13
    $region12: #{tpu_custom_call.1} parent=1 // pred_region
      %36 = dma.done [#allocation3], 768
    $region13: #{tpu_custom_call.1} parent=1 // pred_fallthru
      _
    // Predicated region
    $region14: #{tpu_custom_call.1} parent=1 // pred_check
      _
    $region15: #{tpu_custom_call.1} parent=1 // pred_check_branch
      %38 = sbr.rel (0) target = $region17
    $region16: #{tpu_custom_call.1} parent=1 // pred_region
      %39 = dma.done [#allocation6], 896
    $region17: #{tpu_custom_call.1} parent=1 // pred_fallthru
      _
    %v40 = vld [vmem:[#allocation2] sm:$0xff]
    %s41 = sadd.s32 0, 8
    %s42 = scalar_lea.vmem [#allocation2], %s41
    %v43 = vld [vmem:[%s42] sm:$0xff]
    %s44 = sadd.s32 0, 16
    %s45 = scalar_lea.vmem [#allocation2], %s44
    %v46 = vld [vmem:[%s45] sm:$0xff]
    %s47 = sadd.s32 0, 24
    %s48 = scalar_lea.vmem [#allocation2], %s47
    %v49 = vld [vmem:[%s48] sm:$0xff]
    %s50 = sadd.s32 0, 32
    %s51 = scalar_lea.vmem [#allocation2], %s50
    %v52 = vld [vmem:[%s51] sm:$0xff]
    %s53 = sadd.s32 0, 40
    %s54 = scalar_lea.vmem [#allocation2], %s53
    %v55 = vld [vmem:[%s54] sm:$0xff]
    %v56 = vmul.f32 %v49, %v49
    %v57 = vmul.f32 %v52, %v52
    %v58 = vmul.f32 %v55, %v55
    %v59 = vmul.f32 %v49, %v52
    %v60 = vmul.f32 %v49, %v55
    %v61 = vmul.f32 %v52, %v55
    %v62 = vadd.f32 %v56, %v57
    %v63 = vadd.f32 %v62, %v58
    %vm64 = vcmp.gt.f32.partialorder %v63, 0.0
    %v65 = vsel %vm64, %v63, 1.0
    %v66 = vrsqrt.pop %v65
    %v67 = vmul.f32 %v63, %v66
    %v68 = vmul.f32 %v66, %v66
    %v69 = vmul.f32 %v68, %v66
    %v70 = vmul.f32 %v63, %v67
    %v71 = vand.u32 2147483647, %v67
    %vm72 = vcmp.le.f32.partialorder %v71, 0.7853982
    %vm73 = vcmp.lt.s32.totalorder %v67, 0
    %v74 = vand.u32 %v67, 2139095040
    %v75 = vshrl.u32 %v74, 23
    %v76 = vsub.s32 %v75, 127
    %v77 = vand.u32 2147483647, %v67
    %v78 = vand.u32 %v77, 8388607
    %v79 = vor.u32 %v78, 8388608
    %v80 = vsub.s32 0, %v79
    %v81 = vadd.s32 %v76, 1
    %vm82 = vcmp.gt.s32.totalorder %v81, 0
    %v83 = vsel %vm82, %v81, 0
    %v84 = vshrl.u32 %v83, 5
    %v85 = vand.u32 %v83, 31
    %v86 = vsub.s32 32, %v85
    %v87 = vshrl.u32 683565275, %v86
    %v88 = vshll.u32 683565275, %v85
    %v89 = vshrl.u32 2475754826, %v86
    %v90 = vor.u32 %v88, %v89
    %v91 = vshll.u32 2475754826, %v85
    %v92 = vshrl.u32 2131351028, %v86
    %v93 = vor.u32 %v91, %v92
    %v94 = vshll.u32 2131351028, %v85
    %v95 = vshrl.u32 2102212464, %v86
    %v96 = vor.u32 %v94, %v95
    %v97 = vshll.u32 2102212464, %v85
    %v98 = vshrl.u32 920167782, %v86
    %v99 = vor.u32 %v97, %v98
    %v100 = vshll.u32 920167782, %v85
    %v101 = vshrl.u32 1326507024, %v86
    %v102 = vor.u32 %v100, %v101
    %vm103 = vcmp.lt.s32.totalorder %v84, 1
    %vm104 = vcmp.lt.s32.totalorder %v84, 2
    %vm105 = vcmp.lt.s32.totalorder %v84, 3
    %vm106 = vcmp.lt.s32.totalorder %v84, 4
    %v107 = vsel %vm103, %v87, %v90
    %v108 = vsel %vm106, %v96, 2102212464
    %v109 = vsel %vm105, %v93, %v108
    %v110 = vsel %vm104, %v107, %v109
    %v111 = vsel %vm103, %v90, %v93
    %v112 = vsel %vm106, %v99, 920167782
    %v113 = vsel %vm105, %v96, %v112
    %v114 = vsel %vm104, %v111, %v113
    %v115 = vsel %vm103, %v93, %v96
    %v116 = vsel %vm106, %v102, 1326507024
    %v117 = vsel %vm105, %v99, %v116
    %v118 = vsel %vm104, %v115, %v117
    %v119 = vshll.u32 %v79, 8
    %v120 = vmul.u32.u64.compose %v119, %v118
    %v121 = vextract.low.u32 %v120
    %v122 = vextract.high.u32 %v120
    %v123 = vmul.u32.u64.compose %v119, %v114
    %v124 = vextract.low.u32 %v123
    %v125 = vextract.high.u32 %v123
    %v126 = vmul.u32 %v119, %v110
    %v127 = vadd.s32 %v122, %v124
    %vm128 = vc.u32 %v122, %v124
    %v129 = vadd.s32 %v125, 1
    %v130 = vsel %vm128, %v129, %v125
    %v131 = vadd.s32 %v126, %v130
    %v132 = vadd.s32 %v131, 536870912
    %v133 = vshrl.u32 %v132, 30
    %v134 = vshll.u32 %v133, 30
    %v135 = vsub.s32 %v131, %v134
    %vm136 = vcmp.lt.s32.totalorder %v135, 0
    %v137 = vsub.s32 0, %v135
    %v138 = vsel %vm136, %v137, %v135
    %v139 = vclz %v138
    %v140 = vsub.s32 %v139, 2
    %vm141 = vcmp.gt.s32.totalorder 0, %v140
    %v142 = vsel %vm141, 0, %v140
    %v143 = vsub.s32 32, %v142
    %v144 = vshll.u32 %v135, %v142
    %v145 = vshrl.u32 %v127, %v143
    %v146 = vor.u32 %v144, %v145
    %v147 = vsub.s32 4294967266, %v142
    %v148 = vadd.s32 %v147, 127
    %v149 = vshll.u32 %v148, 23
    %v150 = vor.u32 4788187, %v149
    %v151 = vand.u32 2147483647, %v150
    %v153 = vcvt.s32.f32 %v146
    %v154 = vmul.f32 %v153, %v151
    %v155 = vxor.u32 %v154, 2147483648
    %v156 = vsel %vm73, %v155, %v154
    %v157 = vsub.s32 4, %v133
    %v158 = vsel %vm73, %v157, %v133
    %v159 = vsel %vm72, %v67, %v156
    %v160 = vsel %vm72, 0, %v158
    %v161 = vcosq.f32.pop %v159
    %v162 = vsinq.f32.pop %v159
    %vm163 = vweird.f32 %v67
    %v164 = vadd.s32 %v160, 3
    %v165 = vand.u32 %v164, 3
    %vm166 = vcmp.lt.s32.totalorder %v165, 2
    %vm167 = vcmp.eq.s32.totalorder %v165, 0
    %v168 = vxor.u32 %v162, 2147483648
    %v169 = vsel %vm167, %v161, %v168
    %vm170 = vcmp.eq.s32.totalorder %v165, 2
    %v171 = vxor.u32 %v161, 2147483648
    %v172 = vsel %vm170, %v171, %v162
    %v173 = vsel %vm166, %v169, %v172
    %v174 = vsel %vm163, nan, %v173
    %v175 = vand.u32 2147483647, %v67
    %vm176 = vcmp.le.f32.partialorder %v175, 0.7853982
    %vm177 = vcmp.lt.s32.totalorder %v67, 0
    %v178 = vand.u32 %v67, 2139095040
    %v179 = vshrl.u32 %v178, 23
    %v180 = vsub.s32 %v179, 127
    %v181 = vand.u32 2147483647, %v67
    %v182 = vand.u32 %v181, 8388607
    %v183 = vor.u32 %v182, 8388608
    %v184 = vsub.s32 0, %v183
    %v185 = vadd.s32 %v180, 1
    %vm186 = vcmp.gt.s32.totalorder %v185, 0
    %v187 = vsel %vm186, %v185, 0
    %v188 = vshrl.u32 %v187, 5
    %v189 = vand.u32 %v187, 31
    %v190 = vsub.s32 32, %v189
    %v191 = vshrl.u32 683565275, %v190
    %v192 = vshll.u32 683565275, %v189
    %v193 = vshrl.u32 2475754826, %v190
    %v194 = vor.u32 %v192, %v193
    %v195 = vshll.u32 2475754826, %v189
    %v196 = vshrl.u32 2131351028, %v190
    %v197 = vor.u32 %v195, %v196
    %v198 = vshll.u32 2131351028, %v189
    %v199 = vshrl.u32 2102212464, %v190
    %v200 = vor.u32 %v198, %v199
    %v201 = vshll.u32 2102212464, %v189
    %v202 = vshrl.u32 920167782, %v190
    %v203 = vor.u32 %v201, %v202
    %v204 = vshll.u32 920167782, %v189
    %v205 = vshrl.u32 1326507024, %v190
    %v206 = vor.u32 %v204, %v205
    %vm207 = vcmp.lt.s32.totalorder %v188, 1
    %vm208 = vcmp.lt.s32.totalorder %v188, 2
    %vm209 = vcmp.lt.s32.totalorder %v188, 3
    %vm210 = vcmp.lt.s32.totalorder %v188, 4
    %v211 = vsel %vm207, %v191, %v194
    %v212 = vsel %vm210, %v200, 2102212464
    %v213 = vsel %vm209, %v197, %v212
    %v214 = vsel %vm208, %v211, %v213
    %v215 = vsel %vm207, %v194, %v197
    %v216 = vsel %vm210, %v203, 920167782
    %v217 = vsel %vm209, %v200, %v216
    %v218 = vsel %vm208, %v215, %v217
    %v219 = vsel %vm207, %v197, %v200
    %v220 = vsel %vm210, %v206, 1326507024
    %v221 = vsel %vm209, %v203, %v220
    %v222 = vsel %vm208, %v219, %v221
    %v223 = vshll.u32 %v183, 8
    %v224 = vmul.u32.u64.compose %v223, %v222
    %v225 = vextract.low.u32 %v224
    %v226 = vextract.high.u32 %v224
    %v227 = vmul.u32.u64.compose %v223, %v218
    %v228 = vextract.low.u32 %v227
    %v229 = vextract.high.u32 %v227
    %v230 = vmul.u32 %v223, %v214
    %v231 = vadd.s32 %v226, %v228
    %vm232 = vc.u32 %v226, %v228
    %v233 = vadd.s32 %v229, 1
    %v234 = vsel %vm232, %v233, %v229
    %v235 = vadd.s32 %v230, %v234
    %v236 = vadd.s32 %v235, 536870912
    %v237 = vshrl.u32 %v236, 30
    %v238 = vshll.u32 %v237, 30
    %v239 = vsub.s32 %v235, %v238
    %vm240 = vcmp.lt.s32.totalorder %v239, 0
    %v241 = vsub.s32 0, %v239
    %v242 = vsel %vm240, %v241, %v239
    %v243 = vclz %v242
    %v244 = vsub.s32 %v243, 2
    %vm245 = vcmp.gt.s32.totalorder 0, %v244
    %v246 = vsel %vm245, 0, %v244
    %v247 = vsub.s32 32, %v246
    %v248 = vshll.u32 %v239, %v246
    %v249 = vshrl.u32 %v231, %v247
    %v250 = vor.u32 %v248, %v249
    %v251 = vsub.s32 4294967266, %v246
    %v252 = vadd.s32 %v251, 127
    %v253 = vshll.u32 %v252, 23
    %v254 = vor.u32 4788187, %v253
    %v255 = vand.u32 2147483647, %v254
    %v257 = vcvt.s32.f32 %v250
    %v258 = vmul.f32 %v257, %v255
    %v259 = vxor.u32 %v258, 2147483648
    %v260 = vsel %vm177, %v259, %v258
    %v261 = vsub.s32 4, %v237
    %v262 = vsel %vm177, %v261, %v237
    %v263 = vsel %vm176, %v67, %v260
    %v264 = vsel %vm176, 0, %v262
    %v265 = vcosq.f32.pop %v263
    %v266 = vsinq.f32.pop %v263
    %vm267 = vweird.f32 %v67
    %v268 = vand.u32 %v264, 3
    %vm269 = vcmp.lt.s32.totalorder %v268, 2
    %vm270 = vcmp.eq.s32.totalorder %v268, 0
    %v271 = vxor.u32 %v266, 2147483648
    %v272 = vsel %vm270, %v265, %v271
    %vm273 = vcmp.eq.s32.totalorder %v268, 2
    %v274 = vxor.u32 %v265, 2147483648
    %v275 = vsel %vm273, %v274, %v266
    %v276 = vsel %vm269, %v272, %v275
    %v277 = vsel %vm267, nan, %v276
    %v278 = vmul.f32 %v174, %v66
    %v279 = vsel %vm64, %v278, 0.0
    %v280 = vsub.f32 1.0, %v277
    %v281 = vmul.f32 %v280, %v68
    %v282 = vmul.f32 %v63, 2.755732e-07
    %v283 = vadd.f32 %v282, -2.4801588e-05
    %v284 = vmul.f32 %v63, %v283
    %v285 = vadd.f32 %v284, 0.0013888889
    %v286 = vmul.f32 %v63, %v285
    %v287 = vadd.f32 %v286, -0.041666668
    %v288 = vmul.f32 %v63, %v287
    %v289 = vadd.f32 %v288, 0.5
    %vm290 = vcmp.gt.f32.partialorder %v63, 0.1
    %vm291 = vcmp.lt.f32.partialorder %v63, 1e-06
    %v292 = vsel %vm291, 0.0, %v289
    %v293 = vsel %vm290, %v281, %v292
    %v294 = vsub.f32 %v67, %v174
    %v295 = vmul.f32 %v294, %v69
    %v296 = vmul.f32 %v63, 2.5052108e-08
    %v297 = vadd.f32 %v296, -2.7557319e-06
    %v298 = vmul.f32 %v63, %v297
    %v299 = vadd.f32 %v298, 0.0001984127
    %v300 = vmul.f32 %v63, %v299
    %v301 = vadd.f32 %v300, -0.008333334
    %v302 = vmul.f32 %v63, %v301
    %v303 = vadd.f32 %v302, 0.16666667
    %vm304 = vcmp.gt.f32.partialorder %v70, 0.1
    %v305 = vsel %vm291, 0.0, %v303
    %v306 = vsel %vm304, %v295, %v305
    %v307 = vadd.f32 %v57, %v58
    %v308 = vsub.f32 0.0, %v307
    %v309 = vadd.f32 %v56, %v58
    %v310 = vsub.f32 0.0, %v309
    %v311 = vsub.f32 0.0, %v62
    %v312 = vmul.f32 %v279, %v49
    %v313 = vmul.f32 %v279, %v52
    %v314 = vmul.f32 %v279, %v55
    %v315 = vmul.f32 %v293, %v59
    %v316 = vmul.f32 %v293, %v60
    %v317 = vmul.f32 %v293, %v61
    %v318 = vmul.f32 %v293, %v49
    %v319 = vmul.f32 %v293, %v52
    %v320 = vmul.f32 %v293, %v55
    %v321 = vmul.f32 %v306, %v59
    %v322 = vmul.f32 %v306, %v60
    %v323 = vmul.f32 %v306, %v61
    %v324 = vmul.f32 %v293, %v308
    %v325 = vadd.f32 %v324, 1.0
    %v326 = vsub.f32 %v315, %v314
    %v327 = vadd.f32 %v316, %v313
    %v328 = vadd.f32 %v315, %v314
    %v329 = vmul.f32 %v293, %v310
    %v330 = vadd.f32 %v329, 1.0
    %v331 = vsub.f32 %v317, %v312
    %v332 = vsub.f32 %v316, %v313
    %v333 = vadd.f32 %v317, %v312
    %v334 = vmul.f32 %v293, %v311
    %v335 = vadd.f32 %v334, 1.0
    %v336 = vmul.f32 %v306, %v308
    %v337 = vadd.f32 %v336, 1.0
    %v338 = vsub.f32 %v321, %v320
    %v339 = vadd.f32 %v322, %v319
    %v340 = vadd.f32 %v321, %v320
    %v341 = vmul.f32 %v306, %v310
    %v342 = vadd.f32 %v341, 1.0
    %v343 = vsub.f32 %v323, %v318
    %v344 = vsub.f32 %v322, %v319
    %v345 = vadd.f32 %v323, %v318
    %v346 = vmul.f32 %v306, %v311
    %v347 = vadd.f32 %v346, 1.0
    %v348 = vmul.f32 %v337, %v40
    %v349 = vmul.f32 %v338, %v43
    %v350 = vadd.f32 %v348, %v349
    %v351 = vmul.f32 %v339, %v46
    %v352 = vadd.f32 %v350, %v351
    %v353 = vmul.f32 %v340, %v40
    %v354 = vmul.f32 %v342, %v43
    %v355 = vadd.f32 %v353, %v354
    %v356 = vmul.f32 %v343, %v46
    %v357 = vadd.f32 %v355, %v356
    %v358 = vmul.f32 %v344, %v40
    %v359 = vmul.f32 %v345, %v43
    %v360 = vadd.f32 %v358, %v359
    %v361 = vmul.f32 %v347, %v46
    %v362 = vadd.f32 %v360, %v361
    %v363 = vld [vmem:[#allocation5] sm:$0xff]
    %s364 = scalar_lea.vmem [#allocation5], %s41
    %v365 = vld [vmem:[%s364] sm:$0xff]
    %s366 = scalar_lea.vmem [#allocation5], %s44
    %v367 = vld [vmem:[%s366] sm:$0xff]
    %v368 = vmul.f32 %v325, %v363
    %v369 = vmul.f32 %v326, %v365
    %v370 = vadd.f32 %v368, %v369
    %v371 = vmul.f32 %v327, %v367
    %v372 = vadd.f32 %v370, %v371
    %v373 = vadd.f32 %v372, %v352
    %374 = vst [vmem:[#allocation7] sm:$0xff] %v373
    %v375 = vmul.f32 %v328, %v363
    %v376 = vmul.f32 %v330, %v365
    %v377 = vadd.f32 %v375, %v376
    %v378 = vmul.f32 %v331, %v367
    %v379 = vadd.f32 %v377, %v378
    %v380 = vadd.f32 %v379, %v357
    %s381 = scalar_lea.vmem [#allocation7], %s41
    %382 = vst [vmem:[%s381] sm:$0xff] %v380
    %v383 = vmul.f32 %v332, %v363
    %v384 = vmul.f32 %v333, %v365
    %v385 = vadd.f32 %v383, %v384
    %v386 = vmul.f32 %v335, %v367
    %v387 = vadd.f32 %v385, %v386
    %v388 = vadd.f32 %v387, %v362
    %s389 = scalar_lea.vmem [#allocation7], %s44
    %390 = vst [vmem:[%s389] sm:$0xff] %v388
    %s391 = scalar_lea.vmem [#allocation5], %s47
    %v392 = vld [vmem:[%s391] sm:$0xff]
    %s393 = scalar_lea.vmem [#allocation5], %s50
    %v394 = vld [vmem:[%s393] sm:$0xff]
    %s395 = scalar_lea.vmem [#allocation5], %s53
    %v396 = vld [vmem:[%s395] sm:$0xff]
    %s397 = sadd.s32 0, 48
    %s398 = scalar_lea.vmem [#allocation5], %s397
    %v399 = vld [vmem:[%s398] sm:$0xff]
    %v400 = vmul.f32 %v394, %v394
    %v401 = vmul.f32 %v396, %v396
    %v402 = vmul.f32 %v399, %v399
    %v403 = vmul.f32 %v394, %v396
    %v404 = vmul.f32 %v394, %v399
    %v405 = vmul.f32 %v396, %v399
    %v406 = vmul.f32 %v394, %v392
    %v407 = vmul.f32 %v396, %v392
    %v408 = vmul.f32 %v399, %v392
    %v409 = vadd.f32 %v401, %v402
    %v410 = vmul.f32 %v409, 2.0
    %v411 = vsub.f32 1.0, %v410
    %v412 = vsub.f32 %v403, %v408
    %v413 = vmul.f32 %v412, 2.0
    %v414 = vadd.f32 %v404, %v407
    %v415 = vmul.f32 %v414, 2.0
    %v416 = vadd.f32 %v403, %v408
    %v417 = vmul.f32 %v416, 2.0
    %v418 = vadd.f32 %v400, %v402
    %v419 = vmul.f32 %v418, 2.0
    %v420 = vsub.f32 1.0, %v419
    %v421 = vsub.f32 %v405, %v406
    %v422 = vmul.f32 %v421, 2.0
    %v423 = vsub.f32 %v404, %v407
    %v424 = vmul.f32 %v423, 2.0
    %v425 = vadd.f32 %v405, %v406
    %v426 = vmul.f32 %v425, 2.0
    %v427 = vadd.f32 %v400, %v401
    %v428 = vmul.f32 %v427, 2.0
    %v429 = vsub.f32 1.0, %v428
    %v430 = vmul.f32 %v325, %v411
    %v431 = vmul.f32 %v326, %v417
    %v432 = vadd.f32 %v430, %v431
    %v433 = vmul.f32 %v327, %v424
    %v434 = vadd.f32 %v432, %v433
    %v435 = vmul.f32 %v325, %v413
    %v436 = vmul.f32 %v326, %v420
    %v437 = vadd.f32 %v435, %v436
    %v438 = vmul.f32 %v327, %v426
    %v439 = vadd.f32 %v437, %v438
    %v440 = vmul.f32 %v325, %v415
    %v441 = vmul.f32 %v326, %v422
    %v442 = vadd.f32 %v440, %v441
    %v443 = vmul.f32 %v327, %v429
    %v444 = vadd.f32 %v442, %v443
    %v445 = vmul.f32 %v328, %v411
    %v446 = vmul.f32 %v330, %v417
    %v447 = vadd.f32 %v445, %v446
    %v448 = vmul.f32 %v331, %v424
    %v449 = vadd.f32 %v447, %v448
    %v450 = vmul.f32 %v328, %v413
    %v451 = vmul.f32 %v330, %v420
    %v452 = vadd.f32 %v450, %v451
    %v453 = vmul.f32 %v331, %v426
    %v454 = vadd.f32 %v452, %v453
    %v455 = vmul.f32 %v328, %v415
    %v456 = vmul.f32 %v330, %v422
    %v457 = vadd.f32 %v455, %v456
    %v458 = vmul.f32 %v331, %v429
    %v459 = vadd.f32 %v457, %v458
    %v460 = vmul.f32 %v332, %v411
    %v461 = vmul.f32 %v333, %v417
    %v462 = vadd.f32 %v460, %v461
    %v463 = vmul.f32 %v335, %v424
    %v464 = vadd.f32 %v462, %v463
    %v465 = vmul.f32 %v332, %v413
    %v466 = vmul.f32 %v333, %v420
    %v467 = vadd.f32 %v465, %v466
    %v468 = vmul.f32 %v335, %v426
    %v469 = vadd.f32 %v467, %v468
    %v470 = vmul.f32 %v332, %v415
    %v471 = vmul.f32 %v333, %v422
    %v472 = vadd.f32 %v470, %v471
    %v473 = vmul.f32 %v335, %v429
    %v474 = vadd.f32 %v472, %v473
    %vm475 = vcmp.lt.f32.partialorder %v474, 0.0
    %vm476 = vcmp.gt.f32.partialorder %v434, %v454
    %v477 = vsub.f32 0.0, %v454
    %vm478 = vcmp.lt.f32.partialorder %v434, %v477
    %vm479 = vmand %vm475, %vm476
    %vm480 = vmxor %vm476, 1
    %vm481 = vmand %vm475, %vm480
    %vm482 = vmxor %vm475, 1
    %vm483 = vmand %vm482, %vm478
    %v484 = vadd.f32 %v434, 1.0
    %v485 = vsub.f32 %v484, %v454
    %v486 = vsub.f32 %v485, %v474
    %v487 = vsub.f32 1.0, %v434
    %v488 = vadd.f32 %v487, %v454
    %v489 = vsub.f32 %v488, %v474
    %v490 = vsub.f32 %v487, %v454
    %v491 = vadd.f32 %v490, %v474
    %v492 = vadd.f32 %v484, %v454
    %v493 = vadd.f32 %v492, %v474
    %v494 = vsel %vm483, %v491, %v493
    %v495 = vsel %vm481, %v489, %v494
    %v496 = vsel %vm479, %v486, %v495
    %v497 = vsub.f32 %v469, %v459
    %v498 = vsub.f32 %v444, %v464
    %v499 = vsub.f32 %v449, %v439
    %v500 = vsel %vm483, %v499, %v493
    %v501 = vsel %vm481, %v498, %v500
    %v502 = vsel %vm479, %v497, %v501
    %v503 = vadd.f32 %v439, %v449
    %v504 = vadd.f32 %v464, %v444
    %v505 = vsel %vm483, %v504, %v497
    %v506 = vsel %vm481, %v503, %v505
    %v507 = vsel %vm479, %v486, %v506
    %v508 = vadd.f32 %v459, %v469
    %v509 = vsel %vm483, %v508, %v498
    %v510 = vsel %vm481, %v489, %v509
    %v511 = vsel %vm479, %v503, %v510
    %v512 = vsel %vm483, %v491, %v499
    %v513 = vsel %vm481, %v508, %v512
    %v514 = vsel %vm479, %v504, %v513
    %v515 = vrsqrt.pop %v496
    %v516 = vmul.f32 %v515, 0.5
    %vm517 = vcmp.lt.f32.partialorder %v502, 0.0
    %v518 = vsub.f32 0.0, %v516
    %v519 = vsel %vm517, %v518, %v516
    %v520 = vmul.f32 %v502, %v519
    %s521 = scalar_lea.vmem [#allocation7], %s47
    %522 = vst [vmem:[%s521] sm:$0xff] %v520
    %v523 = vmul.f32 %v507, %v519
    %s524 = scalar_lea.vmem [#allocation7], %s50
    %525 = vst [vmem:[%s524] sm:$0xff] %v523
    %v526 = vmul.f32 %v511, %v519
    %s527 = scalar_lea.vmem [#allocation7], %s53
    %528 = vst [vmem:[%s527] sm:$0xff] %v526
    %v529 = vmul.f32 %v514, %v519
    %s530 = scalar_lea.vmem [#allocation7], %s397
    %531 = vst [vmem:[%s530] sm:$0xff] %v529
    // Predicated region
    $region18: #{tpu_custom_call.1} parent=1 // pred_check
      _
    $region19: #{tpu_custom_call.1} parent=1 // pred_check_branch
      %533 = sbr.rel (0) target = $region21
    $region20: #{tpu_custom_call.1} parent=1 // pred_region
      %s535 = ssub.s32 896, 896
      %536 = vsyncadd [#allocation4], %s535
      %s537 = sshll.u32 [#allocation7], 4
      %s538 = int_to_ptr.vmem [resolvable:$true] %s537
      %543 = dma.vmem_to_hbm [thread:$0]  %s538, 896, %s2, [#allocation4], 128, 128, 8
    $region21: #{tpu_custom_call.1} parent=1 // pred_fallthru
      _
    // Predicated region
    $region22: #{tpu_custom_call.1} parent=1 // pred_check
      _
    $region23: #{tpu_custom_call.1} parent=1 // pred_check_branch
      %545 = sbr.rel (0) target = $region25
    $region24: #{tpu_custom_call.1} parent=1 // pred_region
      %546 = dma.done [#allocation4], 896
    $region25: #{tpu_custom_call.1} parent=1 // pred_fallthru
      _
    %547 = vsyncpa [#allocation3], 1
    %548 = vsyncpa [#allocation6], 1
    %549 = vsyncpa [#allocation4], 1

</llo_original>
